<compile_context>
chip_gen: v7x
topology: tpu7x:2x2x1
jax: 0.10.0
libtpu: 0.0.40
codegen_flags: <defaults>
</compile_context>

<pallas_src>
import functools

import jax
import jax.numpy as jnp
from jax.experimental import pallas as pl
from jax.experimental.pallas import tpu as pltpu

LANES = 128
SUBLANES = 8
BLOCK_BYTES_PER_INPUT = 4 * 1024 * 1024  # 4 MiB / input / block


def _bce_terms(yp, yt, alpha, eps):
    """Element-wise weighted-BCE terms, matching the PyTorch forward exactly."""
    yp = yp.astype(jnp.float32)
    yt = yt.astype(jnp.float32)
    # PyTorch: y_pred.clamp(min=eps)  (lower clamp only)
    yp_c = jnp.maximum(yp, jnp.float32(eps))
    return (jnp.float32(alpha) * yt * jnp.log(yp_c)
            + jnp.float32(1.0 - alpha) * (1.0 - yt) * jnp.log(1.0 - yp_c))


def _loss_kernel(yp_ref, yt_ref, out_ref, *, alpha, eps, tm, rows_last):
    # Two logs go to the EUP slot; the handful of mul/add is VALU work.
    term = _bce_terms(yp_ref[...], yt_ref[...], alpha, eps)

    def partial_sum(t):
        # (tm, 128) -> (tm//8, 8, 128) -> (8, 128): tile-preserving reshape,
        # pure vreg-wise VALU adds, no cross-lane/sublane XLU reduce, and a
        # full unmasked vreg store.
        return t.reshape(tm // SUBLANES, SUBLANES, LANES).sum(axis=0)

    if rows_last is None:
        # Every block is fully valid.
        out_ref[...] = partial_sum(term)
    else:
        i = pl.program_id(0)
        last = pl.num_programs(0) - 1

        @pl.when(i != last)
        def _():
            out_ref[...] = partial_sum(term)

        @pl.when(i == last)
        def _():
            # Mask rows past the end of the array (Pallas pads OOB input
            # reads with unspecified data; select-based where zeroes any
            # NaN/inf those produce).
            rows = jax.lax.broadcasted_iota(jnp.int32, (tm, LANES), 0)
            out_ref[...] = partial_sum(
                jnp.where(rows < rows_last, term, jnp.float32(0.0)))


def custom_loss(y_pred, y_true, alpha=0.97, epsilon=1e-12):
    assert y_pred.shape == y_true.shape
    n = int(y_pred.size)

    yp_flat = jnp.ravel(y_pred)
    yt_flat = jnp.ravel(y_true)

    m_full = n // LANES            # number of full lane-dense rows
    rem = n - m_full * LANES       # < 128 trailing elements -> wrapper tail

    if m_full == 0:
        # Too small for a single lane-dense row; pure-jnp fallback.
        return -jnp.sum(_bce_terms(yp_flat, yt_flat, alpha, epsilon)) / jnp.float32(n)

    # Tile-size selection (per perf feedback): as big as 4 MiB/input/block,
    # sublane granularity matching the packed dtype, and clamped so that
    # grid_m >= 2 whenever possible (keeps both v7x TensorCores busy).
    itemsize = max(jnp.dtype(y_pred.dtype).itemsize,
                   jnp.dtype(y_true.dtype).itemsize)
    gran = max(SUBLANES, 32 // itemsize)               # 8 f32, 16 bf16, 32 i8
    cap = max(gran, (BLOCK_BYTES_PER_INPUT // (LANES * itemsize)) // gran * gran)
    half = (((m_full + 1) // 2) // gran) * gran        # ~half the rows
    tm = max(gran, min(cap, half))
    grid_m = pl.cdiv(m_full, tm)
    rows_last = m_full - (grid_m - 1) * tm             # valid rows in last block
    partial_last = rows_last != tm

    # Main (lane-aligned) portion: reshape is a free bitcast when rem == 0.
    main = m_full * LANES
    yp_main = yp_flat if rem == 0 else yp_flat[:main]
    yt_main = yt_flat if rem == 0 else yt_flat[:main]
    yp2 = yp_main.reshape(m_full, LANES)
    yt2 = yt_main.reshape(m_full, LANES)

    kernel = functools.partial(
        _loss_kernel, alpha=float(alpha), eps=float(epsilon), tm=int(tm),
        rows_last=int(rows_last) if partial_last else None)

    partials = pl.pallas_call(
        kernel,
        out_shape=jax.ShapeDtypeStruct((grid_m, SUBLANES, LANES), jnp.float32),
        grid_spec=pltpu.PrefetchScalarGridSpec(
            num_scalar_prefetch=0,
            grid=(grid_m,),
            in_specs=[
                pl.BlockSpec((tm, LANES), lambda i: (i, 0)),
                pl.BlockSpec((tm, LANES), lambda i: (i, 0)),
            ],
            out_specs=pl.BlockSpec((None, SUBLANES, LANES),
                                   lambda i: (i, 0, 0)),
        ),
        compiler_params=pltpu.CompilerParams(
            dimension_semantics=("parallel",),
            vmem_limit_bytes=32 << 20),
    )(yp2, yt2)

    # Tiny final reduce (+ ragged tail) + mean in the wrapper.
    total = jnp.sum(partials)
    if rem:
        total = total + jnp.sum(
            _bce_terms(yp_flat[main:], yt_flat[main:], alpha, epsilon))
    return -total / jnp.float32(n)


def custom_loss_ref(y_pred, y_true, alpha=0.97, epsilon=1e-12):
    yp_c = jnp.maximum(y_pred, epsilon)
    return -jnp.mean(alpha * y_true * jnp.log(yp_c)
                     + (1 - alpha) * (1 - y_true) * jnp.log(1 - yp_c))


if __name__ == "__main__":
    key = jax.random.PRNGKey(0)
    k1, k2 = jax.random.split(key)

    # Tile-aligned case: (2, 4, 16, 16) = 2048 elements -> 2 grid steps.
    shape = (2, 4, 16, 16)
    y_pred = jax.nn.sigmoid(jax.random.normal(k1, shape, dtype=jnp.float32))
    y_true = (jax.random.uniform(k2, shape) > 0.5).astype(jnp.float32)

    loss = jax.block_until_ready(custom_loss(y_pred, y_true))
    ref = custom_loss_ref(y_pred, y_true)
    assert jnp.allclose(loss, ref, rtol=1e-5, atol=1e-6), (loss, ref)

    # Ragged case: (3, 5, 7, 11) = 1155 elements -> partial last tile + tail.
    shape2 = (3, 5, 7, 11)
    yp2 = jax.nn.sigmoid(jax.random.normal(k1, shape2, dtype=jnp.float32))
    yt2 = (jax.random.uniform(k2, shape2) > 0.5).astype(jnp.float32)
    loss2 = jax.block_until_ready(custom_loss(yp2, yt2))
    ref2 = custom_loss_ref(yp2, yt2)
    assert jnp.allclose(loss2, ref2, rtol=1e-5, atol=1e-6), (loss2, ref2)

    print("KERNEL_OK")
</pallas_src>

<mosaic_0001>
module attributes {stable_mosaic.version = 11 : i64} {
  func.func @_loss_kernel(%arg0: i32, %arg1: memref<8x128xf32, #tpu.memory_space<vmem>>, %arg2: memref<8x128xf32, #tpu.memory_space<vmem>>, %arg3: memref<1x8x128xf32, #tpu.memory_space<vmem>>) attributes {dimension_semantics = [#tpu.dimension_semantics<parallel>], iteration_bounds = array<i64: 2>, scalar_prefetch = 0 : i64, scratch_operands = 0 : i64, tpu.core_type = #tpu.core_type<tc>, window_params = [{transform_indices = @transform_0, window_bounds = array<i64: 8, 128>}, {transform_indices = @transform_1, window_bounds = array<i64: 8, 128>}, {transform_indices = @transform_2, window_bounds = array<i64: 1, 8, 128>}]} {
    %c0 = arith.constant 0 : index
    %c0_0 = arith.constant 0 : index
    %0 = vector.load %arg1[%c0, %c0_0] : memref<8x128xf32, #tpu.memory_space<vmem>>, vector<8x128xf32>
    %c0_1 = arith.constant 0 : index
    %c0_2 = arith.constant 0 : index
    %1 = vector.load %arg2[%c0_1, %c0_2] : memref<8x128xf32, #tpu.memory_space<vmem>>, vector<8x128xf32>
    %cst = arith.constant 9.99999996E-13 : f32
    %2 = vector.broadcast %cst : f32 to vector<8x128xf32>
    %3 = arith.maximumf %0, %2 : vector<8x128xf32>
    %cst_3 = arith.constant 9.700000e-01 : f32
    %4 = vector.broadcast %cst_3 : f32 to vector<8x128xf32>
    %5 = arith.mulf %4, %1 : vector<8x128xf32>
    %6 = math.log %3 : vector<8x128xf32>
    %7 = arith.mulf %5, %6 : vector<8x128xf32>
    %cst_4 = arith.constant 1.000000e+00 : f32
    %8 = vector.broadcast %cst_4 : f32 to vector<8x128xf32>
    %9 = arith.subf %8, %1 : vector<8x128xf32>
    %cst_5 = arith.constant 3.000000e-02 : f32
    %10 = vector.broadcast %cst_5 : f32 to vector<8x128xf32>
    %11 = arith.mulf %10, %9 : vector<8x128xf32>
    %cst_6 = arith.constant 1.000000e+00 : f32
    %12 = vector.broadcast %cst_6 : f32 to vector<8x128xf32>
    %13 = arith.subf %12, %3 : vector<8x128xf32>
    %14 = math.log %13 : vector<8x128xf32>
    %15 = arith.mulf %11, %14 : vector<8x128xf32>
    %16 = arith.addf %7, %15 : vector<8x128xf32>
    %17 = vector.shape_cast %16 : vector<8x128xf32> to vector<1x8x128xf32>
    %cst_7 = arith.constant dense<0.000000e+00> : vector<8x128xf32>
    %18 = vector.multi_reduction <add>, %17, %cst_7 [0] : vector<1x8x128xf32> to vector<8x128xf32>
    %c0_8 = arith.constant 0 : index
    %c0_9 = arith.constant 0 : index
    %c0_10 = arith.constant 0 : index
    %19 = vector.load %arg3[%c0_8, %c0_9, %c0_10] : memref<1x8x128xf32, #tpu.memory_space<vmem>>, vector<1x8x128xf32>
    %20 = vector.shape_cast %19 : vector<1x8x128xf32> to vector<8x128xf32>
    %21 = vector.shape_cast %18 : vector<8x128xf32> to vector<1x8x128xf32>
    tpu.vector_store %arg3[%c0_8, %c0_9, %c0_10], %21 {strides = array<i32>} : memref<1x8x128xf32, #tpu.memory_space<vmem>>, vector<1x8x128xf32>,
    return
  }
  func.func @transform_0(%arg0: i32) -> (i32, i32) {
    %c0_i32 = arith.constant 0 : i32
    %c0_i32_0 = arith.constant 0 : i32
    return %arg0, %c0_i32 : i32, i32
  }
  func.func @transform_1(%arg0: i32) -> (i32, i32) {
    %c0_i32 = arith.constant 0 : i32
    %c0_i32_0 = arith.constant 0 : i32
    return %arg0, %c0_i32 : i32, i32
  }
  func.func @transform_2(%arg0: i32) -> (i32, i32, i32) {
    %c0_i32 = arith.constant 0 : i32
    %c0_i32_0 = arith.constant 0 : i32
    %c0_i32_1 = arith.constant 0 : i32
    return %arg0, %c0_i32, %c0_i32_0 : i32, i32, i32
  }
}

</mosaic_0001>

<llo_original>
// kernel: tpu_custom_call.1
$region0: #{tpu_custom_call.1}
  #allocation0 [shape = 'u32[]', space=smem, size = 0x4, offset = 0x4, fixed_abs, tag = 'smem constant byte address 0x4 - core index']
  #allocation1 [shape = 'u32[144,128]{1,0:T(1,128)}', space=vmem, size = 0x12000, scoped, tag = 'internal scratch']
  %s0 = inlined_call_operand.hbm [shape: f32[16,128], index: 0, kind: input, shape index: {}]
  %s1 = inlined_call_operand.hbm [shape: f32[16,128], index: 1, kind: input, shape index: {}]
  %s2 = inlined_call_operand.hbm [shape: f32[2,8,128], index: 2, kind: output, shape index: {}]
  %s3 = sld [smem:[#allocation0]]
  $region49: #{tpu_custom_call.1} parent=0
    _
  %s5 = ssub.s32 1, %s3
  %s6 = scalar_select 0, %s5, %s3
  $region1: #{tpu_custom_call.1} parent=0
    #allocation2 [shape = 'u8[8192]{0}', space=vmem, size = 0x2000, scoped, tag = 'input window, operand 0']
    #allocation3 [shape = 's32[2]{0}', space=sflag, size = 0x8, scoped, tag = 'scoped memory for tpu_custom_call.1']
    #allocation4 [shape = 's32[2]{0}', space=sflag, size = 0x8, scoped, tag = 'scoped memory for tpu_custom_call.1']
    #allocation5 [shape = 'u8[8192]{0}', space=vmem, size = 0x2000, scoped, tag = 'input window, operand 1']
    #allocation6 [shape = 's32[2]{0}', space=sflag, size = 0x8, scoped, tag = 'scoped memory for tpu_custom_call.1']
    #allocation7 [shape = 'u8[8192]{0}', space=vmem, size = 0x2000, scoped, tag = 'output window, operand 0']
    %7 = vsyncpa [#allocation3], 0
    %s8 = scalar_lea.sflag [#allocation3], 1
    %9 = vsyncpa %s8, 0
    %10 = vsyncpa [#allocation6], 0
    %s11 = scalar_lea.sflag [#allocation6], 1
    %12 = vsyncpa %s11, 0
    %13 = vsyncpa [#allocation4], 0
    %s14 = scalar_lea.sflag [#allocation4], 1
    %15 = vsyncpa %s14, 0
    loop: start=0, step=1, limit=4
    $region2: #{tpu_custom_call.1} parent=1 // loop_pre_header
      _
    $region3: #{tpu_custom_call.1} parent=1 // loop_header
      %s17 = sphi 0, %s21
      %p18 = scmp.ge.s32.totalorder %s17, 4
      %s27 = sphi 0, %s29
      %s30 = sphi 0, %s27
      %s31 = sphi 0, %s30
      %s47 = sphi 0, %s31
      %s53 = sphi 0, %s55
      %s56 = sphi 0, %s53
      %s57 = sphi 0, %s56
      %s73 = sphi 0, %s57
      %s79 = sphi 0, %s81
      %s82 = sphi 0, %s79
      %s83 = sphi 0, %s82
      %s99 = sphi 0, %s83
    $region4: #{tpu_custom_call.1} parent=1 // loop_header_branch
      %20 = sbr.rel (%p18) target = $region8
    $region5: #{tpu_custom_call.1} parent=1 // loop_body
      %s22 = ssub.s32 %s17, 1
      %s23 = ssub.s32 %s17, 2
      %s24 = sadd.s32 %s17, 1
      %s25 = ssub.s32 %s17, %s24
      %p26 = scmp.eq.s32.totalorder %s25, 0
      %s28 = sadd.s32 %s27, 1
      %s29 = scalar_select %p26, %s27, %s28
      %p32 = pneg %p26
      %p33 = scmp.eq.s32.totalorder %s17, 1
      %p34 = por %p32, %p33
      %p35 = scmp.ne.s32.totalorder %s27, %s30
      %p36 = scmp.eq.s32.totalorder %s17, 0
      %p37 = por %p35, %p36
      %p38 = scmp.ne.s32.totalorder %s27, %s30
      %p39 = scmp.eq.s32.totalorder %s22, 1
      %p40 = por %p38, %p39
      %p41 = scmp.ne.s32.totalorder %s30, %s31
      %p42 = scmp.eq.s32.totalorder %s22, 0
      %p43 = por %p41, %p42
      %p44 = scmp.ne.s32.totalorder %s30, %s31
      %p45 = scmp.eq.s32.totalorder %s23, 1
      %p46 = por %p44, %p45
      %p48 = scmp.ne.s32.totalorder %s31, %s47
      %p49 = scmp.eq.s32.totalorder %s23, 0
      %p50 = por %p48, %p49
      %s51 = ssub.s32 %s17, %s24
      %p52 = scmp.eq.s32.totalorder %s51, 0
      %s54 = sadd.s32 %s53, 1
      %s55 = scalar_select %p52, %s53, %s54
      %p58 = pneg %p52
      %p59 = scmp.eq.s32.totalorder %s17, 1
      %p60 = por %p58, %p59
      %p61 = scmp.ne.s32.totalorder %s53, %s56
      %p62 = scmp.eq.s32.totalorder %s17, 0
      %p63 = por %p61, %p62
      %p64 = scmp.ne.s32.totalorder %s53, %s56
      %p65 = scmp.eq.s32.totalorder %s22, 1
      %p66 = por %p64, %p65
      %p67 = scmp.ne.s32.totalorder %s56, %s57
      %p68 = scmp.eq.s32.totalorder %s22, 0
      %p69 = por %p67, %p68
      %p70 = scmp.ne.s32.totalorder %s56, %s57
      %p71 = scmp.eq.s32.totalorder %s23, 1
      %p72 = por %p70, %p71
      %p74 = scmp.ne.s32.totalorder %s57, %s73
      %p75 = scmp.eq.s32.totalorder %s23, 0
      %p76 = por %p74, %p75
      %s77 = ssub.s32 %s17, %s24
      %p78 = scmp.eq.s32.totalorder %s77, 0
      %s80 = sadd.s32 %s79, 1
      %s81 = scalar_select %p78, %s79, %s80
      %p84 = pneg %p78
      %p85 = scmp.eq.s32.totalorder %s17, 1
      %p86 = por %p84, %p85
      %p87 = scmp.ne.s32.totalorder %s79, %s82
      %p88 = scmp.eq.s32.totalorder %s17, 0
      %p89 = por %p87, %p88
      %p90 = scmp.ne.s32.totalorder %s79, %s82
      %p91 = scmp.eq.s32.totalorder %s22, 1
      %p92 = por %p90, %p91
      %p93 = scmp.ne.s32.totalorder %s82, %s83
      %p94 = scmp.eq.s32.totalorder %s22, 0
      %p95 = por %p93, %p94
      %p96 = scmp.ne.s32.totalorder %s82, %s83
      %p97 = scmp.eq.s32.totalorder %s23, 1
      %p98 = por %p96, %p97
      %p100 = scmp.ne.s32.totalorder %s83, %s99
      %p101 = scmp.eq.s32.totalorder %s23, 0
      %p102 = por %p100, %p101
      %p103 = scmp.le.s32.totalorder 1, %s17
      %p104 = scmp.lt.s32.totalorder %s17, 3
      %p105 = pnand %p103, %p104
      %p106 = pneg %p105
      // Predicated region
      $region9: #{tpu_custom_call.1} parent=5 // pred_check
        _
      $region10: #{tpu_custom_call.1} parent=5 // pred_check_branch
        %108 = sbr.rel (%p105) target = $region12
      $region11: #{tpu_custom_call.1} parent=5 // pred_region
        %s109 = ssub.s32 %s17, 1
      $region12: #{tpu_custom_call.1} parent=5 // pred_fallthru
        _
      %p110 = scmp.lt.s32.totalorder %s17, 2
      // Predicated region
      $region13: #{tpu_custom_call.1} parent=5 // pred_check
        %p111 = pneg %p110
      $region14: #{tpu_custom_call.1} parent=5 // pred_check_branch
        %113 = sbr.rel (%p111) target = $region16
      $region15: #{tpu_custom_call.1} parent=5 // pred_region
        // Predicated region
        $region17: #{tpu_custom_call.1} parent=15 // pred_check
          %p114 = pneg %p37
        $region18: #{tpu_custom_call.1} parent=15 // pred_check_branch
          %116 = sbr.rel (%p114) target = $region20
        $region19: #{tpu_custom_call.1} parent=15 // pred_region
          %s117 = sand.u32 %s27, 1
          %s118 = scalar_lea.sflag [#allocation3], %s117
          %s119 = sand.u32 %s27, 1
          %s120 = smul.addr %s119, 8
          %s121 = scalar_lea.vmem [#allocation2], %s120
          %s123 = ssub.s32 128, 128
          %124 = vsyncadd %s118, %s123
          %s125 = smul.addr %s17, 128
          %s126 = scalar_lea.hbm %s0, %s125
          %s128 = sshll.u32 %s121, 4
          %s129 = int_to_ptr.vmem [resolvable:$true] %s128
          %131 = dma.hbm_to_vmem [thread:$0]  %s126, 128, %s129, %s118
        $region20: #{tpu_custom_call.1} parent=15 // pred_fallthru
          _
        // Predicated region
        $region21: #{tpu_custom_call.1} parent=15 // pred_check
          %p132 = pneg %p63
        $region22: #{tpu_custom_call.1} parent=15 // pred_check_branch
          %134 = sbr.rel (%p132) target = $region24
        $region23: #{tpu_custom_call.1} parent=15 // pred_region
          %s135 = sand.u32 %s53, 1
          %s136 = scalar_lea.sflag [#allocation6], %s135
          %s137 = sand.u32 %s53, 1
          %s138 = smul.addr %s137, 8
          %s139 = scalar_lea.vmem [#allocation5], %s138
          %s141 = ssub.s32 128, 128
          %142 = vsyncadd %s136, %s141
          %s143 = smul.addr %s17, 128
          %s144 = scalar_lea.hbm %s1, %s143
          %s146 = sshll.u32 %s139, 4
          %s147 = int_to_ptr.vmem [resolvable:$true] %s146
          %149 = dma.hbm_to_vmem [thread:$0]  %s144, 128, %s147, %s136
        $region24: #{tpu_custom_call.1} parent=15 // pred_fallthru
          _
      $region16: #{tpu_custom_call.1} parent=5 // pred_fallthru
        _
      %p150 = scmp.le.s32.totalorder 1, %s17
      %p151 = scmp.lt.s32.totalorder %s17, 3
      %p152 = pnand %p150, %p151
      %p153 = pneg %p152
      // Predicated region
      $region25: #{tpu_custom_call.1} parent=5 // pred_check
        _
      $region26: #{tpu_custom_call.1} parent=5 // pred_check_branch
        %155 = sbr.rel (%p152) target = $region28
      $region27: #{tpu_custom_call.1} parent=5 // pred_region
        %s156 = ssub.s32 %s17, 1
        %s157 = sand.u32 %s30, 1
        %s158 = scalar_lea.sflag [#allocation3], %s157
        %s159 = sand.u32 %s30, 1
        %s160 = smul.addr %s159, 8
        %s161 = scalar_lea.vmem [#allocation2], %s160
        // Predicated region
        $region29: #{tpu_custom_call.1} parent=27 // pred_check
          %p162 = pneg %p43
        $region30: #{tpu_custom_call.1} parent=27 // pred_check_branch
          %164 = sbr.rel (%p162) target = $region32
        $region31: #{tpu_custom_call.1} parent=27 // pred_region
          %165 = dma.done %s158, 128
        $region32: #{tpu_custom_call.1} parent=27 // pred_fallthru
          _
        %s166 = sand.u32 %s56, 1
        %s167 = scalar_lea.sflag [#allocation6], %s166
        %s168 = sand.u32 %s56, 1
        %s169 = smul.addr %s168, 8
        %s170 = scalar_lea.vmem [#allocation5], %s169
        // Predicated region
        $region33: #{tpu_custom_call.1} parent=27 // pred_check
          %p171 = pneg %p69
        $region34: #{tpu_custom_call.1} parent=27 // pred_check_branch
          %173 = sbr.rel (%p171) target = $region36
        $region35: #{tpu_custom_call.1} parent=27 // pred_region
          %174 = dma.done %s167, 128
        $region36: #{tpu_custom_call.1} parent=27 // pred_fallthru
          _
        %s175 = sand.u32 %s30, 1
        %s176 = scalar_lea.sflag [#allocation3], %s175
        %s177 = sand.u32 %s30, 1
        %s178 = smul.addr %s177, 8
        %s179 = scalar_lea.vmem [#allocation2], %s178
        %p180 = pneg %p43
        %p181 = pneg %p40
        %s182 = sand.u32 %s56, 1
        %s183 = scalar_lea.sflag [#allocation6], %s182
        %s184 = sand.u32 %s56, 1
        %s185 = smul.addr %s184, 8
        %s186 = scalar_lea.vmem [#allocation5], %s185
        %p187 = pneg %p69
        %p188 = pneg %p66
        %p189 = pneg %p95
        %p190 = pneg %p92
        %s191 = sand.u32 %s82, 1
        %s192 = scalar_lea.sflag [#allocation4], %s191
        %s193 = sand.u32 %s82, 1
        %s194 = smul.addr %s193, 8
        %s195 = scalar_lea.vmem [#allocation7], %s194
        %v196 = vld [vmem:[%s161] sm:$0xff]
        %v197 = vld [vmem:[%s170] sm:$0xff]
        %v198 = vmax.f32 %v196, 1e-12
        %v199 = vmul.f32 %v197, 0.97
        %v200 = vlog2.pop %v198
        %v201 = vmul.f32 %v200, 0.6931472
        %v202 = vmul.f32 %v199, %v201
        %v203 = vsub.f32 1.0, %v197
        %v204 = vmul.f32 %v203, 0.03
        %v205 = vsub.f32 1.0, %v198
        %v206 = vlog2.pop %v205
        %v207 = vmul.f32 %v206, 0.6931472
        %v208 = vmul.f32 %v204, %v207
        %v209 = vadd.f32 %v202, %v208
        %v210 = vadd.f32 %v209, 0.0
        %211 = vst [vmem:[%s195] sm:$0xff] %v210
        %s212 = sand.u32 %s82, 1
        %s213 = scalar_lea.sflag [#allocation4], %s212
        %s214 = sand.u32 %s82, 1
        %s215 = smul.addr %s214, 8
        %s216 = scalar_lea.vmem [#allocation7], %s215
        // Predicated region
        $region37: #{tpu_custom_call.1} parent=27 // pred_check
          %p217 = pneg %p92
        $region38: #{tpu_custom_call.1} parent=27 // pred_check_branch
          %219 = sbr.rel (%p217) target = $region40
        $region39: #{tpu_custom_call.1} parent=27 // pred_region
          %s221 = ssub.s32 128, 128
          %222 = vsyncadd %s213, %s221
          %s223 = smul.addr %s22, 128
          %s224 = scalar_lea.hbm %s2, %s223
          %s226 = sshll.u32 %s216, 4
          %s227 = int_to_ptr.vmem [resolvable:$true] %s226
          %229 = dma.vmem_to_hbm [thread:$0]  %s227, 128, %s224, %s213
        $region40: #{tpu_custom_call.1} parent=27 // pred_fallthru
          _
      $region28: #{tpu_custom_call.1} parent=5 // pred_fallthru
        _
      %p230 = scmp.le.s32.totalorder 2, %s17
      // Predicated region
      $region41: #{tpu_custom_call.1} parent=5 // pred_check
        %p231 = pneg %p230
      $region42: #{tpu_custom_call.1} parent=5 // pred_check_branch
        %233 = sbr.rel (%p231) target = $region44
      $region43: #{tpu_custom_call.1} parent=5 // pred_region
        %s234 = ssub.s32 %s17, 2
        // Predicated region
        $region45: #{tpu_custom_call.1} parent=43 // pred_check
          %p235 = pneg %p98
        $region46: #{tpu_custom_call.1} parent=43 // pred_check_branch
          %237 = sbr.rel (%p235) target = $region48
        $region47: #{tpu_custom_call.1} parent=43 // pred_region
          %s238 = sand.u32 %s83, 1
          %s239 = scalar_lea.sflag [#allocation4], %s238
          %s240 = sand.u32 %s83, 1
          %s241 = smul.addr %s240, 8
          %s242 = scalar_lea.vmem [#allocation7], %s241
          %243 = dma.done %s239, 128
        $region48: #{tpu_custom_call.1} parent=43 // pred_fallthru
          _
      $region44: #{tpu_custom_call.1} parent=5 // pred_fallthru
        _
    $region6: #{tpu_custom_call.1} parent=1 // loop_footer
      %s21 = sadd.s32 1, %s17
    $region7: #{tpu_custom_call.1} parent=1 // loop_footer_branch
      %16 = sbr.rel target = $region3
    $region8: #{tpu_custom_call.1} parent=1 // loop_exit
      _
    %244 = vsyncpa [#allocation3], 1
    %s245 = scalar_lea.sflag [#allocation3], 1
    %246 = vsyncpa %s245, 1
    %247 = vsyncpa [#allocation6], 1
    %s248 = scalar_lea.sflag [#allocation6], 1
    %249 = vsyncpa %s248, 1
    %250 = vsyncpa [#allocation4], 1
    %s251 = scalar_lea.sflag [#allocation4], 1
    %252 = vsyncpa %s251, 1

</llo_original>
